<compile_context>
chip_gen: v7x
topology: tpu7x:2x2x1
jax: 0.10.0
libtpu: 0.0.40
codegen_flags: <defaults>
</compile_context>

<pallas_src>
import functools

import jax
import jax.numpy as jnp
from jax.experimental import pallas as pl
from jax.experimental.pallas import tpu as pltpu


def _round_up(x, m):
    return ((x + m - 1) // m) * m


def _pick_tile_n(n, c, itemsize, tile_n=None):
    if tile_n is not None:
        return max(8, _round_up(int(tile_n), 8))
    # Budget the whole input pipeline (2x double-buffered blocks) against ~24 MiB of
    # VMEM using lane-padded footprints: the activation block's class dim rounds up
    # to 128 lanes; each (TILE_N, 1) target/weight block occupies a full 128-lane,
    # 4-byte column in VMEM.  Safe on v5e/v6e (128 MiB) and v7x (64 MiB).
    budget = 24 * 1024 * 1024
    c_pad = _round_up(c, 128)
    row_bytes = c_pad * itemsize + 2 * 128 * 4
    t = budget // (2 * row_bytes)
    t = max(8, (t // 8) * 8)
    t = min(t, _round_up(n, 8))          # no point exceeding the whole problem
    return t


def _weight_nll_kernel(out_ref, tgt_ref, w_ref, partial_ref, *, n_rows):
    o = out_ref[...]                                   # (TILE_N, C), native dtype
    t = tgt_ref[...]                                   # (TILE_N, 1) int32
    w = w_ref[...]                                     # (TILE_N, 1) float32

    tn, c = o.shape

    # Row-validity predicate for the ragged tail block (grid = cdiv(N, TILE_N), no
    # wrapper-side padding): rows past N hold undefined DMA data and must be masked.
    row0 = pl.program_id(0) * tn
    row_idx = row0 + jax.lax.broadcasted_iota(jnp.int32, (tn, 1), 0)   # (TILE_N, 1)
    row_valid = row_idx < n_rows                                       # (TILE_N, 1)

    cls_idx = jax.lax.broadcasted_iota(jnp.int32, (tn, c), 1)          # class per lane
    onehot = (cls_idx == t) & row_valid                                # (TILE_N, C)

    # Gather output[i, target[i]] via masked lane reduction in the native dtype
    # (exact: at most one nonzero per row); cast only the (TILE_N, 1) result to f32.
    picked = jnp.sum(jnp.where(onehot, o, jnp.zeros_like(o)),
                     axis=1, keepdims=True).astype(jnp.float32)        # (TILE_N, 1)

    # Tail weight values are also undefined (could be NaN) -> zero them explicitly.
    w_safe = jnp.where(row_valid, w, jnp.zeros_like(w))

    # Targets outside [0, C) (e.g. -100) match no class -> contribute 0, matching
    # mean(F.nll_loss(reduction='none')) without an ignore mask.  Divide-by-N and
    # the final reduction over blocks happen once in the wrapper.
    partial_ref[0, 0] = -jnp.sum(picked * w_safe)


def weight_nll_loss(output, target, weight, *, tile_n=None):
    """output: (B, S, C), target: (B, S) int, weight: (B,) -> scalar f32."""
    B, S, C = output.shape
    N = B * S

    out_2d = output.reshape(N, C)                      # native dtype, no extra copy
    tgt_2d = target.reshape(N, 1).astype(jnp.int32)

    # PyTorch's (B, S) * (B,) broadcast indexes `weight` by the trailing (seq) axis;
    # as in the original torch module this is only valid when B == S or B == 1.
    w_bs = jnp.broadcast_to(weight.astype(jnp.float32), (B, S))
    w_2d = w_bs.reshape(N, 1)

    itemsize = jnp.dtype(out_2d.dtype).itemsize
    TILE_N = _pick_tile_n(N, C, itemsize, tile_n)
    num_blocks = pl.cdiv(N, TILE_N)

    # Actual double-buffered, lane-padded pipeline footprint (+4 MiB slack for
    # Mosaic's internal scratch); never request the whole of v7x's 64 MiB VMEM.
    c_pad = _round_up(C, 128)
    per_step = TILE_N * (c_pad * itemsize + 2 * 128 * 4)
    vmem_limit = int(min(max(2 * per_step + 4 * 1024 * 1024, 16 * 1024 * 1024),
                         32 * 1024 * 1024))

    cost = pl.CostEstimate(
        flops=2 * N * C,
        transcendentals=0,
        bytes_accessed=N * C * itemsize + 2 * N * 4 + num_blocks * 4,
    )

    kernel = functools.partial(_weight_nll_kernel, n_rows=N)

    partials = pl.pallas_call(
        kernel,
        out_shape=jax.ShapeDtypeStruct((num_blocks, 1), jnp.float32),
        grid=(num_blocks,),
        in_specs=[
            pl.BlockSpec((TILE_N, C), lambda i: (i, 0)),
            pl.BlockSpec((TILE_N, 1), lambda i: (i, 0)),
            pl.BlockSpec((TILE_N, 1), lambda i: (i, 0)),
        ],
        out_specs=pl.BlockSpec(
            (1, 1), lambda i: (i, 0), memory_space=pltpu.MemorySpace.SMEM
        ),
        compiler_params=pltpu.CompilerParams(
            # Row blocks are independent.  On v7x, switch to pltpu.CORE_PARALLEL if a
            # profile shows only one TensorCore streaming.
            dimension_semantics=("parallel",),
            vmem_limit_bytes=vmem_limit,
        ),
        cost_estimate=cost,
    )(out_2d, tgt_2d, w_2d)

    # Per-block partial sums (bounded f32 drift) -> final mean over the true count.
    return jnp.sum(partials) / jnp.float32(N)


def _reference(output, target, weight):
    loss = -jnp.take_along_axis(output, target[..., None], axis=-1)[..., 0]  # (B, S)
    weighted = loss * weight  # trailing-axis broadcast, same as torch
    return jnp.mean(weighted)


if __name__ == "__main__":
    key = jax.random.PRNGKey(0)
    k1, k2, k3 = jax.random.split(key, 3)

    # B == S so the original module's (B,S)*(B,) broadcast is valid, as in torch.
    B, S, C = 10, 10, 32
    logits = jax.random.normal(k1, (B, S, C), dtype=jnp.float32)
    output = jax.nn.log_softmax(logits, axis=-1)        # log-probs, as nll_loss expects
    target = jax.random.randint(k2, (B, S), 0, C, dtype=jnp.int32)
    weight = jax.random.uniform(k3, (B,), dtype=jnp.float32)

    want = jax.block_until_ready(_reference(output, target, weight))

    # Default (auto) tile: single ragged block (N=100, TILE_N=104), tail masked
    # in-kernel — no wrapper-side padding of the activations.
    got = jax.block_until_ready(weight_nll_loss(output, target, weight))
    assert jnp.allclose(got, want, atol=1e-5, rtol=1e-5), (got, want)

    # Small explicit tile: exercises the multi-block grid + partial-sum reduction
    # and the ragged-tail row mask (N=100 -> grid=(7,) with TILE_N=16).
    got_tiled = jax.block_until_ready(
        weight_nll_loss(output, target, weight, tile_n=16)
    )
    assert jnp.allclose(got_tiled, want, atol=1e-5, rtol=1e-5), (got_tiled, want)

    print("KERNEL_OK")
</pallas_src>

<mosaic_0001>
module attributes {stable_mosaic.version = 11 : i64} {
  func.func @_weight_nll_kernel(%arg0: i32, %arg1: memref<104x32xf32, #tpu.memory_space<vmem>>, %arg2: memref<104x1xi32, #tpu.memory_space<vmem>>, %arg3: memref<104x1xf32, #tpu.memory_space<vmem>>, %arg4: memref<1x1xf32, #tpu.memory_space<smem>>) attributes {dimension_semantics = [#tpu.dimension_semantics<parallel>], iteration_bounds = array<i64: 1>, scalar_prefetch = 0 : i64, scratch_operands = 0 : i64, tpu.core_type = #tpu.core_type<tc>, window_params = [{transform_indices = @transform_0, window_bounds = array<i64: 104, 32>}, {transform_indices = @transform_1, window_bounds = array<i64: 104, 1>}, {transform_indices = @transform_2, window_bounds = array<i64: 104, 1>}, {transform_indices = @transform_3, window_bounds = array<i64: 1, 1>}]} {
    %c0 = arith.constant 0 : index
    %c0_0 = arith.constant 0 : index
    %0 = vector.load %arg1[%c0, %c0_0] : memref<104x32xf32, #tpu.memory_space<vmem>>, vector<104x32xf32>
    %c0_1 = arith.constant 0 : index
    %c0_2 = arith.constant 0 : index
    %1 = vector.load %arg2[%c0_1, %c0_2] : memref<104x1xi32, #tpu.memory_space<vmem>>, vector<104x1xi32>
    %c0_3 = arith.constant 0 : index
    %c0_4 = arith.constant 0 : index
    %2 = vector.load %arg3[%c0_3, %c0_4] : memref<104x1xf32, #tpu.memory_space<vmem>>, vector<104x1xf32>
    %c104_i32 = arith.constant 104 : i32
    %3 = arith.muli %arg0, %c104_i32 : i32
    %4 = tpu.iota {dimensions = array<i32: 0>} : vector<104x1xi32>
    %5 = vector.broadcast %3 : i32 to vector<104x1xi32>
    %6 = arith.addi %5, %4 : vector<104x1xi32>
    %c100_i32 = arith.constant 100 : i32
    %7 = vector.broadcast %c100_i32 : i32 to vector<104x1xi32>
    %8 = arith.cmpi slt, %6, %7 : vector<104x1xi32>
    %9 = tpu.iota {dimensions = array<i32: 1>} : vector<104x32xi32>
    %10 = vector.broadcast %1 : vector<104x1xi32> to vector<104x32xi32>
    %11 = arith.cmpi eq, %9, %10 : vector<104x32xi32>
    %12 = vector.broadcast %8 : vector<104x1xi1> to vector<104x32xi1>
    %13 = arith.andi %11, %12 : vector<104x32xi1>
    %cst = arith.constant 0.000000e+00 : f32
    %14 = vector.broadcast %cst : f32 to vector<104x32xf32>
    %15 = arith.select %13, %0, %14 : vector<104x32xi1>, vector<104x32xf32>
    %cst_5 = arith.constant dense<0.000000e+00> : vector<104xf32>
    %16 = vector.multi_reduction <add>, %15, %cst_5 [1] : vector<104x32xf32> to vector<104xf32>
    %17 = vector.shape_cast %16 : vector<104xf32> to vector<104x1xf32>
    %cst_6 = arith.constant 0.000000e+00 : f32
    %18 = vector.broadcast %cst_6 : f32 to vector<104x1xf32>
    %19 = arith.select %8, %2, %18 : vector<104x1xi1>, vector<104x1xf32>
    %20 = arith.mulf %17, %19 : vector<104x1xf32>
    %21 = vector.shape_cast %20 : vector<104x1xf32> to vector<1x104x1xf32>
    %cst_7 = arith.constant dense<0.000000e+00> : vector<1xf32>
    %22 = vector.multi_reduction <add>, %21, %cst_7 [1, 2] : vector<1x104x1xf32> to vector<1xf32>
    %23 = vector.shape_cast %22 : vector<1xf32> to vector<1x1x1xf32>
    %24 = vector.extract %23[0, 0, 0] : f32 from vector<1x1x1xf32>
    %cst_8 = arith.constant 0.000000e+00 : f32
    %25 = arith.subf %cst_8, %24 : f32
    %c0_9 = arith.constant 0 : index
    %c0_10 = arith.constant 0 : index
    %26 = memref.load %arg4[%c0_9, %c0_10] : memref<1x1xf32, #tpu.memory_space<smem>>
    memref.store %25, %arg4[%c0_9, %c0_10] : memref<1x1xf32, #tpu.memory_space<smem>>
    return
  }
  func.func @transform_0(%arg0: i32) -> (i32, i32) {
    %c0_i32 = arith.constant 0 : i32
    %c0_i32_0 = arith.constant 0 : i32
    return %arg0, %c0_i32 : i32, i32
  }
  func.func @transform_1(%arg0: i32) -> (i32, i32) {
    %c0_i32 = arith.constant 0 : i32
    %c0_i32_0 = arith.constant 0 : i32
    return %arg0, %c0_i32 : i32, i32
  }
  func.func @transform_2(%arg0: i32) -> (i32, i32) {
    %c0_i32 = arith.constant 0 : i32
    %c0_i32_0 = arith.constant 0 : i32
    return %arg0, %c0_i32 : i32, i32
  }
  func.func @transform_3(%arg0: i32) -> (i32, i32) {
    %c0_i32 = arith.constant 0 : i32
    %c0_i32_0 = arith.constant 0 : i32
    return %arg0, %c0_i32 : i32, i32
  }
}

</mosaic_0001>

<llo_original>
// kernel: tpu_custom_call.1
$region0: #{tpu_custom_call.1}
  #allocation0 [shape = 'u32[]', space=smem, size = 0x4, offset = 0x4, fixed_abs, tag = 'smem constant byte address 0x4 - core index']
  #allocation1 [shape = 'u32[144,128]{1,0:T(1,128)}', space=vmem, size = 0x12000, scoped, tag = 'internal scratch']
  %s0 = inlined_call_operand.vmem [shape: f32[100,32], index: 0, kind: input, shape index: {}]
  %s1 = inlined_call_operand.vmem [shape: s32[100,1], index: 1, kind: input, shape index: {}]
  %s2 = inlined_call_operand.vmem [shape: f32[100,1], index: 2, kind: input, shape index: {}]
  %s3 = inlined_call_operand.hbm [shape: f32[1,1], index: 3, kind: output, shape index: {}]
  %s4 = sld [smem:[#allocation0]]
  $region22: #{tpu_custom_call.1} parent=0
    _
  %s6 = ssub.s32 1, %s4
  %s7 = scalar_select 0, %s6, %s4
  $region1: #{tpu_custom_call.1} parent=0
    #allocation2 [shape = 'u8[512]{0}', space=smem, size = 0x200, scoped, tag = 'output window, operand 0, single buffered']
    #allocation3 [shape = 's32[1]{0}', space=sflag, size = 0x4, scoped, tag = 'scoped memory for tpu_custom_call.1']
    %8 = vsyncpa [#allocation3], 0
    // Predicated region
    $region2: #{tpu_custom_call.1} parent=1 // pred_check
      _
    $region3: #{tpu_custom_call.1} parent=1 // pred_check_branch
      %10 = sbr.rel (0) target = $region5
    $region4: #{tpu_custom_call.1} parent=1 // pred_region
      _
    $region5: #{tpu_custom_call.1} parent=1 // pred_fallthru
      _
    // Predicated region
    $region6: #{tpu_custom_call.1} parent=1 // pred_check
      _
    $region7: #{tpu_custom_call.1} parent=1 // pred_check_branch
      %12 = sbr.rel (0) target = $region9
    $region8: #{tpu_custom_call.1} parent=1 // pred_region
      _
    $region9: #{tpu_custom_call.1} parent=1 // pred_fallthru
      _
    // Predicated region
    $region10: #{tpu_custom_call.1} parent=1 // pred_check
      _
    $region11: #{tpu_custom_call.1} parent=1 // pred_check_branch
      %14 = sbr.rel (0) target = $region13
    $region12: #{tpu_custom_call.1} parent=1 // pred_region
      _
    $region13: #{tpu_custom_call.1} parent=1 // pred_fallthru
      _
    %v15 = vld [vmem:[%s0] sm:$0xff]
    %v16 = vld [vmem:[%s0 + $0x8] sm:$0xff]
    %v17 = vld [vmem:[%s0 + $0x10] sm:$0xff]
    %v18 = vld [vmem:[%s0 + $0x18] sm:$0xff]
    %v19 = vld [vmem:[%s0 + $0x20] sm:$0xff]
    %v20 = vld [vmem:[%s0 + $0x28] sm:$0xff]
    %v21 = vld [vmem:[%s0 + $0x30] sm:$0xff]
    %v22 = vld [vmem:[%s0 + $0x38] sm:$0xff]
    %v23 = vld [vmem:[%s0 + $0x40] sm:$0xff]
    %v24 = vld [vmem:[%s0 + $0x48] sm:$0xff]
    %v25 = vld [vmem:[%s0 + $0x50] sm:$0xff]
    %v26 = vld [vmem:[%s0 + $0x58] sm:$0xff]
    %v27 = vld [vmem:[%s0 + $0x60] sm:$0xff]
    %v28 = vld [vmem:[%s1] sm:$0xff]
    %v29 = vld [vmem:[%s1 + $0x8] sm:$0xff]
    %v30 = vld [vmem:[%s1 + $0x10] sm:$0xff]
    %v31 = vld [vmem:[%s1 + $0x18] sm:$0xff]
    %v32 = vld [vmem:[%s1 + $0x20] sm:$0xff]
    %v33 = vld [vmem:[%s1 + $0x28] sm:$0xff]
    %v34 = vld [vmem:[%s1 + $0x30] sm:$0xff]
    %v35 = vld [vmem:[%s1 + $0x38] sm:$0xff]
    %v36 = vld [vmem:[%s1 + $0x40] sm:$0xff]
    %v37 = vld [vmem:[%s1 + $0x48] sm:$0xff]
    %v38 = vld [vmem:[%s1 + $0x50] sm:$0xff]
    %v39 = vld [vmem:[%s1 + $0x58] sm:$0xff]
    %v40 = vld [vmem:[%s1 + $0x60] sm:$0xff]
    %v41 = vld [vmem:[%s2] sm:$0xff]
    %v42 = vld [vmem:[%s2 + $0x8] sm:$0xff]
    %v43 = vld [vmem:[%s2 + $0x10] sm:$0xff]
    %v44 = vld [vmem:[%s2 + $0x18] sm:$0xff]
    %v45 = vld [vmem:[%s2 + $0x20] sm:$0xff]
    %v46 = vld [vmem:[%s2 + $0x28] sm:$0xff]
    %v47 = vld [vmem:[%s2 + $0x30] sm:$0xff]
    %v48 = vld [vmem:[%s2 + $0x38] sm:$0xff]
    %v49 = vld [vmem:[%s2 + $0x40] sm:$0xff]
    %v50 = vld [vmem:[%s2 + $0x48] sm:$0xff]
    %v51 = vld [vmem:[%s2 + $0x50] sm:$0xff]
    %v52 = vld [vmem:[%s2 + $0x58] sm:$0xff]
    %v53 = vld [vmem:[%s2 + $0x60] sm:$0xff]
    %s54 = smul.u32 0, 104
    %v55 = vlaneseq
    %v56 = vshrl.u32 %v55, 7
    %v57 = vadd.s32 %v56, 8
    %v58 = vadd.s32 %v56, 16
    %v59 = vadd.s32 %v56, 24
    %v60 = vadd.s32 %v56, 32
    %v61 = vadd.s32 %v56, 40
    %v62 = vadd.s32 %v56, 48
    %v63 = vadd.s32 %v56, 56
    %v64 = vadd.s32 %v56, 64
    %v65 = vadd.s32 %v56, 72
    %v66 = vadd.s32 %v56, 80
    %v67 = vadd.s32 %v56, 88
    %v68 = vadd.s32 %v56, 96
    %v69 = vstv %s54
    %v70 = vadd.s32 %v69, %v56
    %v71 = vadd.s32 %v69, %v57
    %v72 = vadd.s32 %v69, %v58
    %v73 = vadd.s32 %v69, %v59
    %v74 = vadd.s32 %v69, %v60
    %v75 = vadd.s32 %v69, %v61
    %v76 = vadd.s32 %v69, %v62
    %v77 = vadd.s32 %v69, %v63
    %v78 = vadd.s32 %v69, %v64
    %v79 = vadd.s32 %v69, %v65
    %v80 = vadd.s32 %v69, %v66
    %v81 = vadd.s32 %v69, %v67
    %v82 = vadd.s32 %v69, %v68
    %vm83 = vcmp.lt.s32.totalorder %v70, 100
    %vm84 = vcmp.lt.s32.totalorder %v71, 100
    %vm85 = vcmp.lt.s32.totalorder %v72, 100
    %vm86 = vcmp.lt.s32.totalorder %v73, 100
    %vm87 = vcmp.lt.s32.totalorder %v74, 100
    %vm88 = vcmp.lt.s32.totalorder %v75, 100
    %vm89 = vcmp.lt.s32.totalorder %v76, 100
    %vm90 = vcmp.lt.s32.totalorder %v77, 100
    %vm91 = vcmp.lt.s32.totalorder %v78, 100
    %vm92 = vcmp.lt.s32.totalorder %v79, 100
    %vm93 = vcmp.lt.s32.totalorder %v80, 100
    %vm94 = vcmp.lt.s32.totalorder %v81, 100
    %vm95 = vcmp.lt.s32.totalorder %v82, 100
    %v96 = vlaneseq
    %v97 = vand.u32 %v96, 127
    %98 = vset.pattern.permute.xlu0 0
    %99 = vperm.xlu0 %98, %v28
    %v100 = vpop.permute.xlu0 %99
    %101 = vset.pattern.permute.xlu0 0
    %102 = vperm.xlu0 %101, %v29
    %v103 = vpop.permute.xlu0 %102
    %104 = vset.pattern.permute.xlu0 0
    %105 = vperm.xlu0 %104, %v30
    %v106 = vpop.permute.xlu0 %105
    %107 = vset.pattern.permute.xlu0 0
    %108 = vperm.xlu0 %107, %v31
    %v109 = vpop.permute.xlu0 %108
    %110 = vset.pattern.permute.xlu0 0
    %111 = vperm.xlu0 %110, %v32
    %v112 = vpop.permute.xlu0 %111
    %113 = vset.pattern.permute.xlu0 0
    %114 = vperm.xlu0 %113, %v33
    %v115 = vpop.permute.xlu0 %114
    %116 = vset.pattern.permute.xlu0 0
    %117 = vperm.xlu0 %116, %v34
    %v118 = vpop.permute.xlu0 %117
    %119 = vset.pattern.permute.xlu0 0
    %120 = vperm.xlu0 %119, %v35
    %v121 = vpop.permute.xlu0 %120
    %122 = vset.pattern.permute.xlu0 0
    %123 = vperm.xlu0 %122, %v36
    %v124 = vpop.permute.xlu0 %123
    %125 = vset.pattern.permute.xlu0 0
    %126 = vperm.xlu0 %125, %v37
    %v127 = vpop.permute.xlu0 %126
    %128 = vset.pattern.permute.xlu0 0
    %129 = vperm.xlu0 %128, %v38
    %v130 = vpop.permute.xlu0 %129
    %131 = vset.pattern.permute.xlu0 0
    %132 = vperm.xlu0 %131, %v39
    %v133 = vpop.permute.xlu0 %132
    %134 = vset.pattern.permute.xlu0 0
    %135 = vperm.xlu0 %134, %v40
    %v136 = vpop.permute.xlu0 %135
    %vm137 = vcmp.eq.s32.totalorder %v97, %v100
    %vm138 = vcmp.eq.s32.totalorder %v97, %v103
    %vm139 = vcmp.eq.s32.totalorder %v97, %v106
    %vm140 = vcmp.eq.s32.totalorder %v97, %v109
    %vm141 = vcmp.eq.s32.totalorder %v97, %v112
    %vm142 = vcmp.eq.s32.totalorder %v97, %v115
    %vm143 = vcmp.eq.s32.totalorder %v97, %v118
    %vm144 = vcmp.eq.s32.totalorder %v97, %v121
    %vm145 = vcmp.eq.s32.totalorder %v97, %v124
    %vm146 = vcmp.eq.s32.totalorder %v97, %v127
    %vm147 = vcmp.eq.s32.totalorder %v97, %v130
    %vm148 = vcmp.eq.s32.totalorder %v97, %v133
    %vm149 = vcmp.eq.s32.totalorder %v97, %v136
    %v150 = vsel %vm83, 1, 0
    %v151 = vsel %vm84, 1, 0
    %v152 = vsel %vm85, 1, 0
    %v153 = vsel %vm86, 1, 0
    %v154 = vsel %vm87, 1, 0
    %v155 = vsel %vm88, 1, 0
    %v156 = vsel %vm89, 1, 0
    %v157 = vsel %vm90, 1, 0
    %v158 = vsel %vm91, 1, 0
    %v159 = vsel %vm92, 1, 0
    %v160 = vsel %vm93, 1, 0
    %v161 = vsel %vm94, 1, 0
    %v162 = vsel %vm95, 1, 0
    %vm163 = vcmp.eq.s32.totalorder %v150, 1
    %vm164 = vcmp.eq.s32.totalorder %v151, 1
    %vm165 = vcmp.eq.s32.totalorder %v152, 1
    %vm166 = vcmp.eq.s32.totalorder %v153, 1
    %vm167 = vcmp.eq.s32.totalorder %v154, 1
    %vm168 = vcmp.eq.s32.totalorder %v155, 1
    %vm169 = vcmp.eq.s32.totalorder %v156, 1
    %vm170 = vcmp.eq.s32.totalorder %v157, 1
    %vm171 = vcmp.eq.s32.totalorder %v158, 1
    %vm172 = vcmp.eq.s32.totalorder %v159, 1
    %vm173 = vcmp.eq.s32.totalorder %v160, 1
    %vm174 = vcmp.eq.s32.totalorder %v161, 1
    %vm175 = vcmp.eq.s32.totalorder %v162, 1
    %vm176 = vmand %vm137, %vm163
    %vm177 = vmand %vm138, %vm164
    %vm178 = vmand %vm139, %vm165
    %vm179 = vmand %vm140, %vm166
    %vm180 = vmand %vm141, %vm167
    %vm181 = vmand %vm142, %vm168
    %vm182 = vmand %vm143, %vm169
    %vm183 = vmand %vm144, %vm170
    %vm184 = vmand %vm145, %vm171
    %vm185 = vmand %vm146, %vm172
    %vm186 = vmand %vm147, %vm173
    %vm187 = vmand %vm148, %vm174
    %vm188 = vmand %vm149, %vm175
    %v189 = vsel %vm176, %v15, 0.0
    %v190 = vsel %vm177, %v16, 0.0
    %v191 = vsel %vm178, %v17, 0.0
    %v192 = vsel %vm179, %v18, 0.0
    %v193 = vsel %vm180, %v19, 0.0
    %v194 = vsel %vm181, %v20, 0.0
    %v195 = vsel %vm182, %v21, 0.0
    %v196 = vsel %vm183, %v22, 0.0
    %v197 = vsel %vm184, %v23, 0.0
    %v198 = vsel %vm185, %v24, 0.0
    %v199 = vsel %vm186, %v25, 0.0
    %v200 = vsel %vm187, %v26, 0.0
    %v201 = vsel %vm188, %v27, 0.0
    %vm202 = vcmask 261120
    %v203 = vsel %vm202, %v189, 0.0
    %204 = vadd.xlane.f32.xlu0 %v203
    %v205 = vpop.xlane.xlu0 %204
    %v206 = vsel %vm202, %v190, 0.0
    %207 = vadd.xlane.f32.xlu0 %v206
    %v208 = vpop.xlane.xlu0 %207
    %v209 = vsel %vm202, %v191, 0.0
    %210 = vadd.xlane.f32.xlu0 %v209
    %v211 = vpop.xlane.xlu0 %210
    %v212 = vsel %vm202, %v192, 0.0
    %213 = vadd.xlane.f32.xlu0 %v212
    %v214 = vpop.xlane.xlu0 %213
    %v215 = vsel %vm202, %v193, 0.0
    %216 = vadd.xlane.f32.xlu0 %v215
    %v217 = vpop.xlane.xlu0 %216
    %v218 = vsel %vm202, %v194, 0.0
    %219 = vadd.xlane.f32.xlu0 %v218
    %v220 = vpop.xlane.xlu0 %219
    %v221 = vsel %vm202, %v195, 0.0
    %222 = vadd.xlane.f32.xlu0 %v221
    %v223 = vpop.xlane.xlu0 %222
    %v224 = vsel %vm202, %v196, 0.0
    %225 = vadd.xlane.f32.xlu0 %v224
    %v226 = vpop.xlane.xlu0 %225
    %v227 = vsel %vm202, %v197, 0.0
    %228 = vadd.xlane.f32.xlu0 %v227
    %v229 = vpop.xlane.xlu0 %228
    %v230 = vsel %vm202, %v198, 0.0
    %231 = vadd.xlane.f32.xlu0 %v230
    %v232 = vpop.xlane.xlu0 %231
    %v233 = vsel %vm202, %v199, 0.0
    %234 = vadd.xlane.f32.xlu0 %v233
    %v235 = vpop.xlane.xlu0 %234
    %v236 = vsel %vm202, %v200, 0.0
    %237 = vadd.xlane.f32.xlu0 %v236
    %v238 = vpop.xlane.xlu0 %237
    %v239 = vsel %vm202, %v201, 0.0
    %240 = vadd.xlane.f32.xlu0 %v239
    %v241 = vpop.xlane.xlu0 %240
    %v242 = vsel %vm83, %v41, 0.0
    %v243 = vsel %vm84, %v42, 0.0
    %v244 = vsel %vm85, %v43, 0.0
    %v245 = vsel %vm86, %v44, 0.0
    %v246 = vsel %vm87, %v45, 0.0
    %v247 = vsel %vm88, %v46, 0.0
    %v248 = vsel %vm89, %v47, 0.0
    %v249 = vsel %vm90, %v48, 0.0
    %v250 = vsel %vm91, %v49, 0.0
    %v251 = vsel %vm92, %v50, 0.0
    %v252 = vsel %vm93, %v51, 0.0
    %v253 = vsel %vm94, %v52, 0.0
    %v254 = vsel %vm95, %v53, 0.0
    %v255 = vmul.f32 %v205, %v242
    %v256 = vmul.f32 %v208, %v243
    %v257 = vmul.f32 %v211, %v244
    %v258 = vmul.f32 %v214, %v245
    %v259 = vmul.f32 %v217, %v246
    %v260 = vmul.f32 %v220, %v247
    %v261 = vmul.f32 %v223, %v248
    %v262 = vmul.f32 %v226, %v249
    %v263 = vmul.f32 %v229, %v250
    %v264 = vmul.f32 %v232, %v251
    %v265 = vmul.f32 %v235, %v252
    %v266 = vmul.f32 %v238, %v253
    %v267 = vmul.f32 %v241, %v254
    %vm268 = vcmask 7168
    %v269 = vsel %vm268, %v255, 0.0
    %v270 = vsel %vm268, %v256, 0.0
    %v271 = vadd.f32 %v269, %v270
    %v272 = vsel %vm268, %v257, 0.0
    %v273 = vadd.f32 %v271, %v272
    %v274 = vsel %vm268, %v258, 0.0
    %v275 = vadd.f32 %v273, %v274
    %v276 = vsel %vm268, %v259, 0.0
    %v277 = vadd.f32 %v275, %v276
    %v278 = vsel %vm268, %v260, 0.0
    %v279 = vadd.f32 %v277, %v278
    %v280 = vsel %vm268, %v261, 0.0
    %v281 = vadd.f32 %v279, %v280
    %v282 = vsel %vm268, %v262, 0.0
    %v283 = vadd.f32 %v281, %v282
    %v284 = vsel %vm268, %v263, 0.0
    %v285 = vadd.f32 %v283, %v284
    %v286 = vsel %vm268, %v264, 0.0
    %v287 = vadd.f32 %v285, %v286
    %v288 = vsel %vm268, %v265, 0.0
    %v289 = vadd.f32 %v287, %v288
    %v290 = vsel %vm268, %v266, 0.0
    %v291 = vadd.f32 %v289, %v290
    %v292 = vsel %vm268, %v267, 0.0
    %v293 = vadd.f32 %v291, %v292
    %294 = vadd.xlane.f32.xlu0 %v293
    %v295 = vpop.xlane.xlu0 %294
    %v296 = vrot.slane %v295, 4
    %v297 = vadd.f32 %v295, %v296
    %v298 = vrot.slane %v297, 2
    %v299 = vadd.f32 %v297, %v298
    %v300 = vrot.slane %v299, 1
    %v301 = vadd.f32 %v299, %v300
    %s302 = vtos %v301
    %s303 = ssub.f32 0.0, %s302
    %s304 = scalar_lea.smem [#allocation2], 0
    %305 = sst [smem:[%s304]] %s303
    // Predicated region
    $region14: #{tpu_custom_call.1} parent=1 // pred_check
      _
    $region15: #{tpu_custom_call.1} parent=1 // pred_check_branch
      %307 = sbr.rel (0) target = $region17
    $region16: #{tpu_custom_call.1} parent=1 // pred_region
      %s309 = ssub.s32 16, 16
      %310 = vsyncadd [#allocation3], %s309
      %313 = dma.smem_to_hbm [#allocation2], 16, %s3, [#allocation3]
    $region17: #{tpu_custom_call.1} parent=1 // pred_fallthru
      _
    // Predicated region
    $region18: #{tpu_custom_call.1} parent=1 // pred_check
      _
    $region19: #{tpu_custom_call.1} parent=1 // pred_check_branch
      %315 = sbr.rel (0) target = $region21
    $region20: #{tpu_custom_call.1} parent=1 // pred_region
      %316 = dma.done [#allocation3], 16
    $region21: #{tpu_custom_call.1} parent=1 // pred_fallthru
      _
    %317 = sfence
    %318 = vsyncpa [#allocation3], 1

</llo_original>
